<compile_context>
chip_gen: v7x
topology: tpu7x:2x2x1
jax: 0.10.0
libtpu: 0.0.40
codegen_flags: <defaults>
</compile_context>

<pallas_src>
import functools

import jax
import jax.numpy as jnp
from jax.experimental import pallas as pl
from jax.experimental.pallas import tpu as pltpu


_LN_EPS = 1e-6


def _round_up(x, m):
    return ((x + m - 1) // m) * m


def _vmem_capacity_bytes():
    """Per-chip VMEM capacity (64 MiB v7x, 128 MiB v5e/v6e); conservative fallback."""
    try:
        return int(pltpu.get_tpu_info().vmem_capacity_bytes)
    except Exception:
        return 64 << 20


# ------------------------------- kernels ----------------------------------- #

def adaln_modulation_kernel(emb_ref, ws_ref, wh_ref, bs_ref, bh_ref,
                            g_ref, b_ref):
    """One-shot: g = 1 + SiLU(emb) @ W_scale + b_scale ; b = SiLU(emb) @ W_shift + b_shift."""
    e = emb_ref[...].astype(jnp.float32)
    e = e * jax.nn.sigmoid(e)                                   # SiLU
    g_ref[...] = (1.0
                  + jnp.dot(e, ws_ref[...].astype(jnp.float32),
                            preferred_element_type=jnp.float32)
                  + bs_ref[...].astype(jnp.float32))
    b_ref[...] = (jnp.dot(e, wh_ref[...].astype(jnp.float32),
                          preferred_element_type=jnp.float32)
                  + bh_ref[...].astype(jnp.float32))


def adaln_norm_kernel(g_ref, b_ref, x_ref, o_ref, *, d_valid):
    """Hot path: LayerNorm (no affine, eps=1e-6) + per-batch (1+scale)/shift modulation.

    x_ref block is (1, t_tile, d_pad); padded lanes (>= d_valid) are zero in HBM,
    so the mean over d_valid is exact; the variance masks padded lanes explicitly
    (two-pass form for numerical robustness).
    """
    x = x_ref[0].astype(jnp.float32)                            # (t_tile, d_pad)
    d_pad = x.shape[-1]
    d_inv = 1.0 / d_valid
    mu = jnp.sum(x, axis=-1, keepdims=True) * d_inv             # zeros in pad lanes -> exact
    xc = x - mu
    if d_valid != d_pad:
        mask = jax.lax.broadcasted_iota(jnp.int32, x.shape, 1) < d_valid
        xc_v = jnp.where(mask, xc, 0.0)
    else:
        xc_v = xc
    var = jnp.sum(xc_v * xc_v, axis=-1, keepdims=True) * d_inv  # two-pass variance
    inv = jax.lax.rsqrt(var + _LN_EPS)
    # g_ref already holds (1 + scale); padded output lanes are garbage-but-finite
    # and are sliced off in the wrapper.
    o_ref[0] = (xc * inv * g_ref[...] + b_ref[...]).astype(o_ref.dtype)


# ------------------------------- tiling ------------------------------------- #

def _pick_t_tile(B, t_total, d_pad, itemsize, vmem_budget_bytes,
                 target_slab_bytes=2 << 20, min_grid_steps=16):
    """Byte-budgeted time tile: ~2 MiB streamed input per step, within the VMEM
    budget, with enough grid steps for megacore; snapped to a multiple-of-8
    divisor of t_total (t_total is a multiple of 8, so 8 always qualifies)."""
    row_bytes = d_pad * itemsize
    # (1) ~target_slab_bytes of streamed input per grid step.
    t = max(8, target_slab_bytes // row_bytes)
    # (2) fit double-buffered in+out slabs plus f32 working copies in the budget.
    per_row_vmem = d_pad * (4 * itemsize + 8)
    t = min(t, max(8, vmem_budget_bytes // per_row_vmem))
    # (3) keep >= min_grid_steps grid steps (v7x megacore + pipeline ramp).
    steps_along_t = max(1, -(-min_grid_steps // max(B, 1)))     # ceil
    t = min(t, max(8, t_total // steps_along_t))
    # (4) snap down to a multiple of 8 that divides t_total.
    t = min(t, t_total)
    t -= t % 8
    t = max(t, 8)
    while t_total % t:
        t -= 8
    return t


# ------------------------------- wrapper ------------------------------------ #

def adaln_forward(h, emb, params, *, t_tile=None):
    B, T, D = h.shape
    E = emb.shape[-1]
    we, be = params["we"], params["be"]
    itemsize = jnp.dtype(h.dtype).itemsize

    d_pad = _round_up(D, 128)      # lane-dense stores (biggest single measured lever)
    t_total = _round_up(T, 8)      # guarantees a multiple-of-8 divisor exists
    vmem_cap = _vmem_capacity_bytes()

    # Pre-split and lane-pad the (E, 2D) projection so no kernel slices at a
    # ragged lane offset and the modulation outputs are already (B, d_pad).
    w_scale = jnp.pad(we[:, :D], ((0, 0), (0, d_pad - D)))
    w_shift = jnp.pad(we[:, D:], ((0, 0), (0, d_pad - D)))
    b_scale = jnp.pad(be[:, :D], ((0, 0), (0, d_pad - D)))
    b_shift = jnp.pad(be[:, D:], ((0, 0), (0, d_pad - D)))

    # ---- (1) one-shot modulation projection: (B, E) -> g = 1+scale, b = shift ---- #
    # Grid-less call: whole operands sit in VMEM once (no double-buffering of the
    # (E, d_pad) weights), with an explicit VMEM limit derived from the footprint.
    proj_bytes = (B * E + 2 * E * d_pad + 2 * d_pad + 4 * B * d_pad) * 4 + (2 << 20)
    g, b = pl.pallas_call(
        adaln_modulation_kernel,
        out_shape=(jax.ShapeDtypeStruct((B, d_pad), jnp.float32),
                   jax.ShapeDtypeStruct((B, d_pad), jnp.float32)),
        compiler_params=pltpu.CompilerParams(
            vmem_limit_bytes=int(min(vmem_cap, max(proj_bytes, 16 << 20)))),
    )(emb, w_scale, w_shift, b_scale, b_shift)

    # ---- (2) streaming LayerNorm + modulation over (B, T) ---- #
    x = h
    if (t_total, d_pad) != (T, D):
        # Zero-pad in the wrapper; sliced off after the pallas_call.
        x = jnp.pad(h, ((0, 0), (0, t_total - T), (0, d_pad - D)))

    if t_tile is None:
        t_tile = _pick_t_tile(B, t_total, d_pad, itemsize, vmem_cap // 2)
    assert t_total % t_tile == 0 and t_tile % 8 == 0, "t_tile must be a multiple-of-8 divisor of padded T"
    grid = (B, t_total // t_tile)

    slab_bytes = t_tile * d_pad * itemsize
    vmem_needed = (4 * slab_bytes            # double-buffered input + output slabs
                   + 2 * t_tile * d_pad * 4  # f32 working copies inside the kernel
                   + 4 * d_pad * 4           # g/b blocks (double-buffered)
                   + (2 << 20))              # slack
    vmem_limit = int(min(vmem_cap, max(vmem_needed, 16 << 20)))  # never below the footprint

    cost = pl.CostEstimate(
        flops=int(8 * B * t_total * d_pad),                      # sums, normalize, modulate (rough)
        transcendentals=int(B * t_total),                        # one rsqrt per row
        bytes_accessed=int(2 * B * t_total * d_pad * itemsize    # x in + out
                           + 2 * B * d_pad * 4 * (t_total // t_tile)),
    )

    g_spec = pl.BlockSpec((1, d_pad), lambda bi, ti: (bi, 0))
    b_spec = pl.BlockSpec((1, d_pad), lambda bi, ti: (bi, 0))
    x_spec = pl.BlockSpec((1, t_tile, d_pad), lambda bi, ti: (bi, ti, 0))
    out_spec = pl.BlockSpec((1, t_tile, d_pad), lambda bi, ti: (bi, ti, 0))

    out = pl.pallas_call(
        functools.partial(adaln_norm_kernel, d_valid=D),
        out_shape=jax.ShapeDtypeStruct((B, t_total, d_pad), h.dtype),
        grid_spec=pltpu.PrefetchScalarGridSpec(
            num_scalar_prefetch=0,
            grid=grid,
            in_specs=[g_spec, b_spec, x_spec],
            out_specs=out_spec,
        ),
        compiler_params=pltpu.CompilerParams(
            dimension_semantics=("parallel", "parallel"),
            vmem_limit_bytes=vmem_limit,
        ),
        cost_estimate=cost,
    )(g, b, x)

    if (t_total, d_pad) != (T, D):
        out = out[:, :T, :D]
    return out


# ----------------------------- params / reference --------------------------- #

def init_params(key, latent_dim, embed_dim=None, dtype=jnp.float32):
    if embed_dim is None:
        embed_dim = latent_dim
    k1, k2 = jax.random.split(key)
    s = 0.02
    return {
        # emb_layers[1]: Linear(embed_dim, 2*latent_dim), stored (in, out).
        # zero_module() zeroes these in the PyTorch init; small random values
        # here keep the forward-pass test non-trivial.
        "we": (jax.random.normal(k1, (embed_dim, 2 * latent_dim)) * s).astype(dtype),
        "be": (jax.random.normal(k2, (1, 2 * latent_dim)) * s).astype(dtype),
    }


def adaln_reference(h, emb, params):
    """Pure-JAX reference mirroring the PyTorch forward."""
    e = emb * jax.nn.sigmoid(emb)
    emb_out = e @ params["we"] + params["be"]
    D = h.shape[-1]
    scale, shift = emb_out[:, :D], emb_out[:, D:]
    mean = jnp.mean(h, axis=-1, keepdims=True)
    var = jnp.mean((h - mean) ** 2, axis=-1, keepdims=True)
    hn = (h - mean) / jnp.sqrt(var + 1e-6)
    return hn * (1.0 + scale[:, None, :]) + shift[:, None, :]


if __name__ == "__main__":
    B, T, D, E = 2, 8, 32, 32   # batch, seq, latent_dim, embed_dim

    key = jax.random.PRNGKey(0)
    kh, ke, kp = jax.random.split(key, 3)
    h = jax.random.normal(kh, (B, T, D), dtype=jnp.float32)
    emb = jax.random.normal(ke, (B, E), dtype=jnp.float32)
    params = init_params(kp, D, E)

    y = jax.block_until_ready(adaln_forward(h, emb, params))

    y_ref = adaln_reference(h, emb, params)
    assert y.shape == y_ref.shape, "shape mismatch vs reference"
    assert jnp.allclose(y, y_ref, atol=1e-4, rtol=1e-4), "mismatch vs reference"

    print("KERNEL_OK")
</pallas_src>

<mosaic_0001>
module attributes {stable_mosaic.version = 11 : i64} {
  func.func @adaln_modulation_kernel(%arg0: memref<2x32xf32, #tpu.memory_space<vmem>>, %arg1: memref<32x128xf32, #tpu.memory_space<vmem>>, %arg2: memref<32x128xf32, #tpu.memory_space<vmem>>, %arg3: memref<1x128xf32, #tpu.memory_space<vmem>>, %arg4: memref<1x128xf32, #tpu.memory_space<vmem>>, %arg5: memref<2x128xf32, #tpu.memory_space<vmem>>, %arg6: memref<2x128xf32, #tpu.memory_space<vmem>>) attributes {dimension_semantics = [], scalar_prefetch = 0 : i64, scratch_operands = 0 : i64, tpu.core_type = #tpu.core_type<tc>} {
    %c0 = arith.constant 0 : index
    %c0_0 = arith.constant 0 : index
    %0 = vector.load %arg0[%c0, %c0_0] : memref<2x32xf32, #tpu.memory_space<vmem>>, vector<2x32xf32>
    %1 = arith.negf %0 : vector<2x32xf32>
    %2 = math.exp %1 : vector<2x32xf32>
    %cst = arith.constant 1.000000e+00 : f32
    %3 = vector.broadcast %cst : f32 to vector<2x32xf32>
    %4 = arith.addf %3, %2 : vector<2x32xf32>
    %5 = arith.divf %3, %4 : vector<2x32xf32>
    %6 = arith.mulf %0, %5 : vector<2x32xf32>
    %c0_1 = arith.constant 0 : index
    %c0_2 = arith.constant 0 : index
    %7 = vector.load %arg1[%c0_1, %c0_2] : memref<32x128xf32, #tpu.memory_space<vmem>>, vector<32x128xf32>
    %cst_3 = arith.constant dense<0.000000e+00> : vector<2x128xf32>
    %8 = tpu.matmul %6, %7, %cst_3 {dimension_numbers = #tpu.dot_dimension_numbers<[1], [0], [0], [1], [0, 0, 1, 1], [], []>} : vector<2x32xf32>, vector<32x128xf32>, vector<2x128xf32> -> vector<2x128xf32>
    %cst_4 = arith.constant 1.000000e+00 : f32
    %9 = vector.broadcast %cst_4 : f32 to vector<2x128xf32>
    %10 = arith.addf %9, %8 : vector<2x128xf32>
    %c0_5 = arith.constant 0 : index
    %c0_6 = arith.constant 0 : index
    %11 = vector.load %arg3[%c0_5, %c0_6] : memref<1x128xf32, #tpu.memory_space<vmem>>, vector<1x128xf32>
    %12 = vector.broadcast %11 : vector<1x128xf32> to vector<2x128xf32>
    %13 = arith.addf %10, %12 : vector<2x128xf32>
    %c0_7 = arith.constant 0 : index
    %c0_8 = arith.constant 0 : index
    %14 = vector.load %arg5[%c0_7, %c0_8] : memref<2x128xf32, #tpu.memory_space<vmem>>, vector<2x128xf32>
    tpu.vector_store %arg5[%c0_7, %c0_8], %13 {strides = array<i32>} : memref<2x128xf32, #tpu.memory_space<vmem>>, vector<2x128xf32>,
    %c0_9 = arith.constant 0 : index
    %c0_10 = arith.constant 0 : index
    %15 = vector.load %arg2[%c0_9, %c0_10] : memref<32x128xf32, #tpu.memory_space<vmem>>, vector<32x128xf32>
    %cst_11 = arith.constant dense<0.000000e+00> : vector<2x128xf32>
    %16 = tpu.matmul %6, %15, %cst_11 {dimension_numbers = #tpu.dot_dimension_numbers<[1], [0], [0], [1], [0, 0, 1, 1], [], []>} : vector<2x32xf32>, vector<32x128xf32>, vector<2x128xf32> -> vector<2x128xf32>
    %c0_12 = arith.constant 0 : index
    %c0_13 = arith.constant 0 : index
    %17 = vector.load %arg4[%c0_12, %c0_13] : memref<1x128xf32, #tpu.memory_space<vmem>>, vector<1x128xf32>
    %18 = vector.broadcast %17 : vector<1x128xf32> to vector<2x128xf32>
    %19 = arith.addf %16, %18 : vector<2x128xf32>
    %c0_14 = arith.constant 0 : index
    %c0_15 = arith.constant 0 : index
    %20 = vector.load %arg6[%c0_14, %c0_15] : memref<2x128xf32, #tpu.memory_space<vmem>>, vector<2x128xf32>
    tpu.vector_store %arg6[%c0_14, %c0_15], %19 {strides = array<i32>} : memref<2x128xf32, #tpu.memory_space<vmem>>, vector<2x128xf32>,
    return
  }
}

</mosaic_0001>

<llo_original>
// kernel: tpu_custom_call.1
$region0: #{tpu_custom_call.1}
  #allocation0 [shape = 'u32[]', space=smem, size = 0x4, offset = 0x4, fixed_abs, tag = 'smem constant byte address 0x4 - core index']
  #allocation1 [shape = 'u32[144,128]{1,0:T(1,128)}', space=vmem, size = 0x12000, scoped, tag = 'internal scratch']
  %s0 = inlined_call_operand.hbm [shape: f32[2,32], index: 0, kind: input, shape index: {}]
  %s1 = inlined_call_operand.hbm [shape: f32[32,128], index: 1, kind: input, shape index: {}]
  %s2 = inlined_call_operand.hbm [shape: f32[32,128], index: 2, kind: input, shape index: {}]
  %s3 = inlined_call_operand.vmem [shape: f32[1,128], index: 3, kind: input, shape index: {}]
  %s4 = inlined_call_operand.vmem [shape: f32[1,128], index: 4, kind: input, shape index: {}]
  %s5 = inlined_call_operand.hbm [shape: f32[2,128], index: 5, kind: output, shape index: {0}]
  %s6 = inlined_call_operand.hbm [shape: f32[2,128], index: 6, kind: output, shape index: {1}]
  %7 = xla_tuple %s5, %s6
  %s8 = sld [smem:[#allocation0]]
  $region50: #{tpu_custom_call.1} parent=0
    _
  %s10 = ssub.s32 1, %s8
  %s11 = scalar_select 0, %s10, %s8
  $region1: #{tpu_custom_call.1} parent=0
    #allocation2 [shape = 'u8[1024]{0}', space=vmem, size = 0x400, scoped, tag = 'input window, operand 0, single buffered']
    #allocation3 [shape = 's32[1]{0}', space=sflag, size = 0x4, scoped, tag = 'scoped memory for tpu_custom_call.1']
    #allocation4 [shape = 's32[1]{0}', space=sflag, size = 0x4, scoped, tag = 'scoped memory for tpu_custom_call.1']
    #allocation5 [shape = 'u8[16384]{0}', space=vmem, size = 0x4000, scoped, tag = 'input window, operand 1, single buffered']
    #allocation6 [shape = 's32[1]{0}', space=sflag, size = 0x4, scoped, tag = 'scoped memory for tpu_custom_call.1']
    #allocation7 [shape = 'u8[16384]{0}', space=vmem, size = 0x4000, scoped, tag = 'input window, operand 2, single buffered']
    #allocation8 [shape = 'u8[1024]{0}', space=vmem, size = 0x400, scoped, tag = 'output window, operand 0, single buffered']
    #allocation9 [shape = 'u8[1024]{0}', space=vmem, size = 0x400, scoped, tag = 'output window, operand 1, single buffered']
    #allocation10 [shape = 's32[1]{0}', space=sflag, size = 0x4, scoped, tag = 'scoped memory for tpu_custom_call.1']
    %12 = vsyncpa [#allocation3], 0
    %13 = vsyncpa [#allocation6], 0
    %14 = vsyncpa [#allocation4], 0
    %15 = vsyncpa [#allocation10], 0
    // Predicated region
    $region2: #{tpu_custom_call.1} parent=1 // pred_check
      _
    $region3: #{tpu_custom_call.1} parent=1 // pred_check_branch
      %17 = sbr.rel (0) target = $region5
    $region4: #{tpu_custom_call.1} parent=1 // pred_region
      %s19 = ssub.s32 32, 32
      %20 = vsyncadd [#allocation3], %s19
      %s22 = sshll.u32 [#allocation2], 4
      %s23 = int_to_ptr.vmem [resolvable:$true] %s22
      %25 = dma.hbm_to_vmem [thread:$0]  %s0, 32, %s23, [#allocation3]
    $region5: #{tpu_custom_call.1} parent=1 // pred_fallthru
      _
    // Predicated region
    $region6: #{tpu_custom_call.1} parent=1 // pred_check
      _
    $region7: #{tpu_custom_call.1} parent=1 // pred_check_branch
      %27 = sbr.rel (0) target = $region9
    $region8: #{tpu_custom_call.1} parent=1 // pred_region
      %s29 = ssub.s32 512, 512
      %30 = vsyncadd [#allocation6], %s29
      %s31 = sshll.u32 [#allocation5], 4
      %s32 = int_to_ptr.vmem [resolvable:$true] %s31
      %37 = dma.hbm_to_vmem [thread:$0]  %s1, 512, %s32, [#allocation6], 128, 128, 8
    $region9: #{tpu_custom_call.1} parent=1 // pred_fallthru
      _
    // Predicated region
    $region10: #{tpu_custom_call.1} parent=1 // pred_check
      _
    $region11: #{tpu_custom_call.1} parent=1 // pred_check_branch
      %39 = sbr.rel (0) target = $region13
    $region12: #{tpu_custom_call.1} parent=1 // pred_region
      %s41 = ssub.s32 512, 512
      %42 = vsyncadd [#allocation6], %s41
      %s43 = sshll.u32 [#allocation7], 4
      %s44 = int_to_ptr.vmem [resolvable:$true] %s43
      %49 = dma.hbm_to_vmem [thread:$0]  %s2, 512, %s44, [#allocation6], 128, 128, 8
    $region13: #{tpu_custom_call.1} parent=1 // pred_fallthru
      _
    // Predicated region
    $region14: #{tpu_custom_call.1} parent=1 // pred_check
      _
    $region15: #{tpu_custom_call.1} parent=1 // pred_check_branch
      %51 = sbr.rel (0) target = $region17
    $region16: #{tpu_custom_call.1} parent=1 // pred_region
      _
    $region17: #{tpu_custom_call.1} parent=1 // pred_fallthru
      _
    // Predicated region
    $region18: #{tpu_custom_call.1} parent=1 // pred_check
      _
    $region19: #{tpu_custom_call.1} parent=1 // pred_check_branch
      %53 = sbr.rel (0) target = $region21
    $region20: #{tpu_custom_call.1} parent=1 // pred_region
      _
    $region21: #{tpu_custom_call.1} parent=1 // pred_fallthru
      _
    // Predicated region
    $region22: #{tpu_custom_call.1} parent=1 // pred_check
      _
    $region23: #{tpu_custom_call.1} parent=1 // pred_check_branch
      %55 = sbr.rel (0) target = $region25
    $region24: #{tpu_custom_call.1} parent=1 // pred_region
      %56 = dma.done [#allocation3], 32
    $region25: #{tpu_custom_call.1} parent=1 // pred_fallthru
      _
    // Predicated region
    $region26: #{tpu_custom_call.1} parent=1 // pred_check
      _
    $region27: #{tpu_custom_call.1} parent=1 // pred_check_branch
      %58 = sbr.rel (0) target = $region29
    $region28: #{tpu_custom_call.1} parent=1 // pred_region
      %59 = dma.done [#allocation6], 512
    $region29: #{tpu_custom_call.1} parent=1 // pred_fallthru
      _
    // Predicated region
    $region30: #{tpu_custom_call.1} parent=1 // pred_check
      _
    $region31: #{tpu_custom_call.1} parent=1 // pred_check_branch
      %61 = sbr.rel (0) target = $region33
    $region32: #{tpu_custom_call.1} parent=1 // pred_region
      %62 = dma.done [#allocation6], 512
    $region33: #{tpu_custom_call.1} parent=1 // pred_fallthru
      _
    %v63 = vld [vmem:[#allocation2] sm:$0x3]
    %v64 = vxor.u32 %v63, 2147483648
    %v65 = vmul.f32 %v64, 1.442695
    %v66 = vpow.pop %v65
    %v67 = vadd.f32 %v66, 1.0
    %v68 = vrcp.pop %v67
    %v69 = vmul.f32 1.0, %v68
    %v70 = vmul.f32 %v63, %v69
    %v71 = vld [vmem:[#allocation5] sm:$0xff]
    %v72 = vld [vmem:[#allocation5 + $0x8] sm:$0xff]
    %v73 = vld [vmem:[#allocation5 + $0x10] sm:$0xff]
    %v74 = vld [vmem:[#allocation5 + $0x18] sm:$0xff]
    %vm75 = vcmask 261120
    %v77 = vsel %vm75, %v70, 0
    %79 = vmatprep.subr.mxu0 0.0
    %80 = vmatpush1.msra.mxu0 %v71
    %81 = vmatprep.subr.mxu0 0.0
    %82 = vmatpush1.msra.mxu0 %v72
    %83 = vmatprep.subr.mxu0 0.0
    %84 = vmatpush1.msra.mxu0 %v73
    %85 = vmatprep.subr.mxu0 0.0
    %86 = vmatpush1.msra.mxu0 %v74
    %87 = vmatprep.subr.mxu0 0.0
    %88 = vmatpush1.msra.mxu0 0.0
    %89 = vmatprep.subr.mxu0 0.0
    %90 = vmatpush1.msra.mxu0 0.0
    %91 = vmatprep.subr.mxu0 0.0
    %92 = vmatpush1.msra.mxu0 0.0
    %93 = vmatprep.subr.mxu0 0.0
    %94 = vmatpush1.msra.mxu0 0.0
    %95 = vmatprep.subr.mxu0 0.0
    %96 = vmatpush1.msra.mxu0 0.0
    %97 = vmatprep.subr.mxu0 0.0
    %98 = vmatpush1.msra.mxu0 0.0
    %99 = vmatprep.subr.mxu0 0.0
    %100 = vmatpush1.msra.mxu0 0.0
    %101 = vmatprep.subr.mxu0 0.0
    %102 = vmatpush1.msra.mxu0 0.0
    %103 = vmatprep.subr.mxu0 0.0
    %104 = vmatpush1.msra.mxu0 0.0
    %105 = vmatprep.subr.mxu0 0.0
    %106 = vmatpush1.msra.mxu0 0.0
    %107 = vmatprep.subr.mxu0 0.0
    %108 = vmatpush1.msra.mxu0 0.0
    %109 = vmatprep.subr.mxu0 0.0
    %110 = vmatpush1.msra.mxu0 0.0
    %111 = vmatprep.subr.mxu0 0.0
    %112 = vmatpush1.msra.mxu0 0.0
    %113 = vmatprep.subr.mxu0 0.0
    %114 = vmatpush1.msra.mxu0 0.0
    %115 = vmatprep.subr.mxu0 0.0
    %116 = vmatpush1.msra.mxu0 0.0
    %117 = vmatprep.subr.mxu0 0.0
    %118 = vmatpush1.msra.mxu0 0.0
    %119 = vmatprep.subr.mxu0 0.0
    %120 = vmatpush1.msra.mxu0 0.0
    %121 = vmatprep.subr.mxu0 0.0
    %122 = vmatpush1.msra.mxu0 0.0
    %123 = vmatprep.subr.mxu0 0.0
    %124 = vmatpush1.msra.mxu0 0.0
    %125 = vmatprep.subr.mxu0 0.0
    %126 = vmatpush1.msra.mxu0 0.0
    %127 = vmatprep.subr.mxu0 0.0
    %128 = vmatpush1.msra.mxu0 0.0
    %129 = vmatprep.subr.mxu0 0.0
    %130 = vmatpush1.msra.mxu0 0.0
    %131 = vmatprep.subr.mxu0 0.0
    %132 = vmatpush1.msra.mxu0 0.0
    %133 = vmatprep.subr.mxu0 0.0
    %134 = vmatpush1.msra.mxu0 0.0
    %135 = vmatprep.subr.mxu0 0.0
    %136 = vmatpush1.msra.mxu0 0.0
    %137 = vmatprep.subr.mxu0 0.0
    %138 = vmatpush1.msra.mxu0 0.0
    %139 = vmatprep.subr.mxu0 0.0
    %140 = vmatpush1.msra.mxu0 0.0
    %141 = vmatprep.subr.mxu0 0.0
    %142 = vmatpush1.msra.mxu0 0.0
    %143 = vmatprep.mubr.f32.mxu0 0.0
    %144 = vmatmul.mubr.f32.gmra.mrb[0].mxu0 %v77
    %v145 = vpop.f32.mrb[0].mxu0
    %v146 = vadd.f32 1.0, %v145
    %v147 = vpop.f32.mrb[0].mxu0
    %148 = vdwg.mxu0
    %v149 = vld [vmem:[%s3] sm:$0x1]
    %v151 = vlaneseq
    %v152 = vshrl.u32 %v151, 7
    %v153 = vsub.s32 0, %v152
    %v154 = vrot.slane %v149, %v153
    %v156 = vadd.f32 %v146, %v154
    %157 = vst [vmem:[#allocation8] sm:$0x3] %v156
    %v158 = vld [vmem:[#allocation7] sm:$0xff]
    %v159 = vld [vmem:[#allocation7 + $0x8] sm:$0xff]
    %v160 = vld [vmem:[#allocation7 + $0x10] sm:$0xff]
    %v161 = vld [vmem:[#allocation7 + $0x18] sm:$0xff]
    %v162 = vld [vmem:[%s4] sm:$0x1]
    %v164 = vlaneseq
    %v165 = vshrl.u32 %v164, 7
    %v166 = vsub.s32 0, %v165
    %v167 = vrot.slane %v162, %v166
    %169 = vmatprep.subr.mxu0 0.0
    %170 = vmatpush1.msra.mxu0 %v158
    %171 = vmatprep.subr.mxu0 0.0
    %172 = vmatpush1.msra.mxu0 %v159
    %173 = vmatprep.subr.mxu0 0.0
    %174 = vmatpush1.msra.mxu0 %v160
    %175 = vmatprep.subr.mxu0 0.0
    %176 = vmatpush1.msra.mxu0 %v161
    %177 = vmatprep.subr.mxu0 0.0
    %178 = vmatpush1.msra.mxu0 0.0
    %179 = vmatprep.subr.mxu0 0.0
    %180 = vmatpush1.msra.mxu0 0.0
    %181 = vmatprep.subr.mxu0 0.0
    %182 = vmatpush1.msra.mxu0 0.0
    %183 = vmatprep.subr.mxu0 0.0
    %184 = vmatpush1.msra.mxu0 0.0
    %185 = vmatprep.subr.mxu0 0.0
    %186 = vmatpush1.msra.mxu0 0.0
    %187 = vmatprep.subr.mxu0 0.0
    %188 = vmatpush1.msra.mxu0 0.0
    %189 = vmatprep.subr.mxu0 0.0
    %190 = vmatpush1.msra.mxu0 0.0
    %191 = vmatprep.subr.mxu0 0.0
    %192 = vmatpush1.msra.mxu0 0.0
    %193 = vmatprep.subr.mxu0 0.0
    %194 = vmatpush1.msra.mxu0 0.0
    %195 = vmatprep.subr.mxu0 0.0
    %196 = vmatpush1.msra.mxu0 0.0
    %197 = vmatprep.subr.mxu0 0.0
    %198 = vmatpush1.msra.mxu0 0.0
    %199 = vmatprep.subr.mxu0 0.0
    %200 = vmatpush1.msra.mxu0 0.0
    %201 = vmatprep.subr.mxu0 0.0
    %202 = vmatpush1.msra.mxu0 0.0
    %203 = vmatprep.subr.mxu0 0.0
    %204 = vmatpush1.msra.mxu0 0.0
    %205 = vmatprep.subr.mxu0 0.0
    %206 = vmatpush1.msra.mxu0 0.0
    %207 = vmatprep.subr.mxu0 0.0
    %208 = vmatpush1.msra.mxu0 0.0
    %209 = vmatprep.subr.mxu0 0.0
    %210 = vmatpush1.msra.mxu0 0.0
    %211 = vmatprep.subr.mxu0 0.0
    %212 = vmatpush1.msra.mxu0 0.0
    %213 = vmatprep.subr.mxu0 0.0
    %214 = vmatpush1.msra.mxu0 0.0
    %215 = vmatprep.subr.mxu0 0.0
    %216 = vmatpush1.msra.mxu0 0.0
    %217 = vmatprep.subr.mxu0 0.0
    %218 = vmatpush1.msra.mxu0 0.0
    %219 = vmatprep.subr.mxu0 0.0
    %220 = vmatpush1.msra.mxu0 0.0
    %221 = vmatprep.subr.mxu0 0.0
    %222 = vmatpush1.msra.mxu0 0.0
    %223 = vmatprep.subr.mxu0 0.0
    %224 = vmatpush1.msra.mxu0 0.0
    %225 = vmatprep.subr.mxu0 0.0
    %226 = vmatpush1.msra.mxu0 0.0
    %227 = vmatprep.subr.mxu0 0.0
    %228 = vmatpush1.msra.mxu0 0.0
    %229 = vmatprep.subr.mxu0 0.0
    %230 = vmatpush1.msra.mxu0 0.0
    %231 = vmatprep.subr.mxu0 0.0
    %232 = vmatpush1.msra.mxu0 0.0
    %233 = vmatprep.mubr.f32.mxu0 0.0
    %234 = vmatmul.mubr.f32.gmra.mrb[0].mxu0 %v77
    %v235 = vpop.f32.mrb[0].mxu0
    %v236 = vadd.f32 %v167, %v235
    %v237 = vpop.f32.mrb[0].mxu0
    %238 = vdwg.mxu0
    %239 = vst [vmem:[#allocation9] sm:$0x3] %v236
    // Predicated region
    $region34: #{tpu_custom_call.1} parent=1 // pred_check
      _
    $region35: #{tpu_custom_call.1} parent=1 // pred_check_branch
      %241 = sbr.rel (0) target = $region37
    $region36: #{tpu_custom_call.1} parent=1 // pred_region
      %s243 = ssub.s32 32, 32
      %244 = vsyncadd [#allocation4], %s243
      %s246 = sshll.u32 [#allocation8], 4
      %s247 = int_to_ptr.vmem [resolvable:$true] %s246
      %249 = dma.vmem_to_hbm [thread:$0]  %s247, 32, %s5, [#allocation4]
    $region37: #{tpu_custom_call.1} parent=1 // pred_fallthru
      _
    // Predicated region
    $region38: #{tpu_custom_call.1} parent=1 // pred_check
      _
    $region39: #{tpu_custom_call.1} parent=1 // pred_check_branch
      %251 = sbr.rel (0) target = $region41
    $region40: #{tpu_custom_call.1} parent=1 // pred_region
      %s253 = ssub.s32 32, 32
      %254 = vsyncadd [#allocation10], %s253
      %s256 = sshll.u32 [#allocation9], 4
      %s257 = int_to_ptr.vmem [resolvable:$true] %s256
      %259 = dma.vmem_to_hbm [thread:$0]  %s257, 32, %s6, [#allocation10]
    $region41: #{tpu_custom_call.1} parent=1 // pred_fallthru
      _
    // Predicated region
    $region42: #{tpu_custom_call.1} parent=1 // pred_check
      _
    $region43: #{tpu_custom_call.1} parent=1 // pred_check_branch
      %261 = sbr.rel (0) target = $region45
    $region44: #{tpu_custom_call.1} parent=1 // pred_region
      %262 = dma.done [#allocation4], 32
    $region45: #{tpu_custom_call.1} parent=1 // pred_fallthru
      _
    // Predicated region
    $region46: #{tpu_custom_call.1} parent=1 // pred_check
      _
    $region47: #{tpu_custom_call.1} parent=1 // pred_check_branch
      %264 = sbr.rel (0) target = $region49
    $region48: #{tpu_custom_call.1} parent=1 // pred_region
      %265 = dma.done [#allocation10], 32
    $region49: #{tpu_custom_call.1} parent=1 // pred_fallthru
      _
    %266 = vsyncpa [#allocation3], 1
    %267 = vsyncpa [#allocation6], 1
    %268 = vsyncpa [#allocation4], 1
    %269 = vsyncpa [#allocation10], 1

</llo_original>
